<compile_context>
chip_gen: v7x
topology: tpu7x:2x2x1
jax: 0.10.0
libtpu: 0.0.40
codegen_flags: <defaults>
</compile_context>

<pallas_src>
import functools

import jax
import jax.numpy as jnp
from jax.experimental import pallas as pl
from jax.experimental.pallas import tpu as pltpu

EPS = 1e-5  # nn.InstanceNorm2d default eps


# ----------------------------- Pallas kernel ------------------------------

def _adain_kernel(tr, x_ref, sb_ref, o_ref):
    # rows = (batch, channel) pairs; lanes = flattened H*W (lane-dense).
    i = pl.program_id(0)

    x = x_ref[...].astype(jnp.float32)
    mean = jnp.mean(x, axis=-1, keepdims=True)
    xm = x - mean                                        # reused for var + norm
    var = jnp.mean(xm * xm, axis=-1, keepdims=True)      # biased, like torch

    # Per-row [shift | mult] sidecar is resident in VMEM (constant index_map);
    # slice this block's rows instead of re-DMAing a tiny tile every step.
    start = i * tr
    if tr % 8 == 0:
        start = pl.multiple_of(start, 8)
    sb = sb_ref[pl.ds(start, tr), :].astype(jnp.float32)  # (tr, 2)
    shift = sb[:, 0:1]
    scale = (1.0 + sb[:, 1:2]) * jax.lax.rsqrt(var + EPS)  # fold rsqrt (EUP) in

    o_ref[...] = (xm * scale + shift).astype(o_ref.dtype)


# ------------------------------ tile sizing -------------------------------

def _row_tile(R, HW, itemsize, target_bytes=4 * 1024 * 1024,
              min_block_bytes=256 * 1024):
    """Pick the row tile for the (R, HW) streaming kernel.

    - tr divides R and is a multiple of the dtype's native sublane tile
      (8 f32 / 16 bf16 / 32 int8); otherwise fall back to tr = R (full dim is
      always a legal block).
    - Aim for ~4 MB blocks: amortizes the ~0.35 us per-grid-step overhead and
      sits at the measured HBM-roofline knee for streaming kernels.
    - If everything fits in one block, still split into >=2 grid steps whenever
      the pieces stay >= min_block_bytes, so both v7x TensorCores get work.
    """
    min_rows = max(8, 32 // itemsize)
    if R % min_rows != 0:
        return R
    cands = [d for d in range(min_rows, R + 1, min_rows) if R % d == 0]
    under = [d for d in cands if d * HW * itemsize <= target_bytes]
    tr = max(under) if under else cands[0]
    if tr == R:  # single step -> try to expose >=2 parallel steps (megacore)
        smaller = [d for d in cands
                   if d < R and d * HW * itemsize >= min_block_bytes]
        if smaller:
            tr = max(smaller)
    return tr


# ------------------------------ forward pass ------------------------------

def adain(x, s, lin_w, lin_b):
    """AdaIn forward.  x: (B, C, H, W) NCHW, s: (B, style_dim).

    lin_w: (2C, style_dim) PyTorch (out, in) layout, lin_b: (2C,).
    """
    B, C, H, W = x.shape
    assert lin_w.shape[0] == 2 * C

    # Style projection: tiny (B,S)@(S,2C) GEMM -- deliberately left to XLA
    # (a dedicated Pallas call would waste an MXU tile and its own dispatch).
    proj = (s.astype(jnp.float32) @ jnp.transpose(lin_w).astype(jnp.float32)
            + lin_b.astype(jnp.float32))                        # (B, 2C)

    # Row r = b*C + c matches x.reshape(B*C, H*W) ordering.
    side = jnp.stack([proj[:, :C].reshape(-1),                  # shift
                      proj[:, C:].reshape(-1)], axis=-1)        # mult -> (R, 2)

    R, HW = B * C, H * W
    xr = x.reshape(R, HW)       # pure reshape (no transpose): spatial on lanes
    itemsize = jnp.dtype(x.dtype).itemsize
    tr = _row_tile(R, HW, itemsize)

    # VMEM budget: in + out blocks double-buffered, plus the resident sidecar,
    # plus a little headroom.  Cap at 56 MiB so it fits v7x's 64 MiB VMEM.
    block_bytes = tr * HW * itemsize
    needed = 4 * block_bytes + side.size * 4 + (2 << 20)
    vmem_limit = int(min(max(needed, 16 << 20), 56 << 20))
    # TODO(synk): for very large H*W where even the min row tile blows this
    # budget, add an HW-tiled two-pass (stats, then normalize) path.

    out = pl.pallas_call(
        functools.partial(_adain_kernel, tr),
        out_shape=jax.ShapeDtypeStruct((R, HW), x.dtype),
        grid=(R // tr,),
        in_specs=[
            pl.BlockSpec((tr, HW), lambda i: (i, 0)),
            pl.BlockSpec((R, 2), lambda i: (0, 0)),   # resident, fetched once
        ],
        out_specs=pl.BlockSpec((tr, HW), lambda i: (i, 0)),
        compiler_params=pltpu.CompilerParams(
            # Rows are independent -> both v7x TensorCores can split the grid.
            dimension_semantics=("parallel",),
            vmem_limit_bytes=vmem_limit,
        ),
    )(xr, side)
    return out.reshape(B, C, H, W)


# --------------------------------- driver ---------------------------------

if __name__ == "__main__":
    B, C, H, W = 2, 64, 16, 16
    style_dim = 64

    key = jax.random.PRNGKey(0)
    kx, ks, kw, kb = jax.random.split(key, 4)
    x = jax.random.normal(kx, (B, C, H, W), jnp.float32)
    s = jax.random.normal(ks, (B, style_dim), jnp.float32)
    lin_w = 0.05 * jax.random.normal(kw, (2 * C, style_dim), jnp.float32)
    lin_b = 0.05 * jax.random.normal(kb, (2 * C,), jnp.float32)

    fwd = jax.jit(adain)
    out = fwd(x, s, lin_w, lin_b)
    jax.block_until_ready(out)

    # Pure-JAX reference (matches torch InstanceNorm2d(affine=False) + AdaIn).
    proj = s @ lin_w.T + lin_b
    bias = proj[:, :C][:, :, None, None]
    mult = proj[:, C:][:, :, None, None]
    mean = x.mean(axis=(2, 3), keepdims=True)
    var = ((x - mean) ** 2).mean(axis=(2, 3), keepdims=True)
    ref = (x - mean) / jnp.sqrt(var + EPS) * (1.0 + mult) + bias

    assert out.shape == (B, C, H, W) and out.dtype == jnp.float32
    assert jnp.allclose(out, ref, atol=1e-4, rtol=1e-4)
    print("KERNEL_OK")
</pallas_src>

<mosaic_0001>
module attributes {stable_mosaic.version = 11 : i64} {
  func.func @_adain_kernel(%arg0: i32, %arg1: memref<128x256xf32, #tpu.memory_space<vmem>>, %arg2: memref<128x2xf32, #tpu.memory_space<vmem>>, %arg3: memref<128x256xf32, #tpu.memory_space<vmem>>) attributes {dimension_semantics = [#tpu.dimension_semantics<parallel>], iteration_bounds = array<i64: 1>, scalar_prefetch = 0 : i64, scratch_operands = 0 : i64, tpu.core_type = #tpu.core_type<tc>, window_params = [{transform_indices = @transform_0, window_bounds = array<i64: 128, 256>}, {pipeline_mode = #tpu.pipeline_mode<synchronous>, transform_indices = @transform_1, window_bounds = array<i64: 128, 2>}, {transform_indices = @transform_2, window_bounds = array<i64: 128, 256>}]} {
    %c0 = arith.constant 0 : index
    %c0_0 = arith.constant 0 : index
    %0 = vector.load %arg1[%c0, %c0_0] : memref<128x256xf32, #tpu.memory_space<vmem>>, vector<128x256xf32>
    %cst = arith.constant dense<0.000000e+00> : vector<128xf32>
    %1 = vector.multi_reduction <add>, %0, %cst [1] : vector<128x256xf32> to vector<128xf32>
    %2 = vector.shape_cast %1 : vector<128xf32> to vector<128x1xf32>
    %cst_1 = arith.constant 2.560000e+02 : f32
    %3 = vector.broadcast %cst_1 : f32 to vector<128x1xf32>
    %4 = arith.divf %2, %3 : vector<128x1xf32>
    %5 = vector.broadcast %4 : vector<128x1xf32> to vector<128x256xf32>
    %6 = arith.subf %0, %5 : vector<128x256xf32>
    %7 = arith.mulf %6, %6 : vector<128x256xf32>
    %cst_2 = arith.constant dense<0.000000e+00> : vector<128xf32>
    %8 = vector.multi_reduction <add>, %7, %cst_2 [1] : vector<128x256xf32> to vector<128xf32>
    %9 = vector.shape_cast %8 : vector<128xf32> to vector<128x1xf32>
    %cst_3 = arith.constant 2.560000e+02 : f32
    %10 = vector.broadcast %cst_3 : f32 to vector<128x1xf32>
    %11 = arith.divf %9, %10 : vector<128x1xf32>
    %c128_i32 = arith.constant 128 : i32
    %12 = arith.muli %arg0, %c128_i32 : i32
    %13 = tpu.assume_multiple %12, 8 : i32
    %14 = arith.index_cast %13 : i32 to index
    %c0_4 = arith.constant 0 : index
    %15 = vector.load %arg2[%14, %c0_4] : memref<128x2xf32, #tpu.memory_space<vmem>>, vector<128x2xf32>
    %16 = vector.extract_strided_slice %15 {offsets = [0, 0], sizes = [128, 1], strides = [1, 1]} : vector<128x2xf32> to vector<128x1xf32>
    %17 = vector.extract_strided_slice %15 {offsets = [0, 1], sizes = [128, 1], strides = [1, 1]} : vector<128x2xf32> to vector<128x1xf32>
    %cst_5 = arith.constant 1.000000e+00 : f32
    %18 = vector.broadcast %cst_5 : f32 to vector<128x1xf32>
    %19 = arith.addf %18, %17 : vector<128x1xf32>
    %cst_6 = arith.constant 9.99999974E-6 : f32
    %20 = vector.broadcast %cst_6 : f32 to vector<128x1xf32>
    %21 = arith.addf %11, %20 : vector<128x1xf32>
    %22 = math.rsqrt %21 : vector<128x1xf32>
    %23 = arith.mulf %19, %22 : vector<128x1xf32>
    %24 = vector.broadcast %23 : vector<128x1xf32> to vector<128x256xf32>
    %25 = arith.mulf %6, %24 : vector<128x256xf32>
    %26 = vector.broadcast %16 : vector<128x1xf32> to vector<128x256xf32>
    %27 = arith.addf %25, %26 : vector<128x256xf32>
    %c0_7 = arith.constant 0 : index
    %c0_8 = arith.constant 0 : index
    %28 = vector.load %arg3[%c0_7, %c0_8] : memref<128x256xf32, #tpu.memory_space<vmem>>, vector<128x256xf32>
    tpu.vector_store %arg3[%c0_7, %c0_8], %27 {strides = array<i32>} : memref<128x256xf32, #tpu.memory_space<vmem>>, vector<128x256xf32>,
    return
  }
  func.func @transform_0(%arg0: i32) -> (i32, i32) {
    %c0_i32 = arith.constant 0 : i32
    %c0_i32_0 = arith.constant 0 : i32
    return %arg0, %c0_i32 : i32, i32
  }
  func.func @transform_1(%arg0: i32) -> (i32, i32) {
    %c0_i32 = arith.constant 0 : i32
    %c0_i32_0 = arith.constant 0 : i32
    %c0_i32_1 = arith.constant 0 : i32
    return %c0_i32, %c0_i32_0 : i32, i32
  }
  func.func @transform_2(%arg0: i32) -> (i32, i32) {
    %c0_i32 = arith.constant 0 : i32
    %c0_i32_0 = arith.constant 0 : i32
    return %arg0, %c0_i32 : i32, i32
  }
}

</mosaic_0001>

<llo_original>
// kernel: adain.1
$region0: #{adain.1}
  #allocation0 [shape = 'u32[]', space=smem, size = 0x4, offset = 0x4, fixed_abs, tag = 'smem constant byte address 0x4 - core index']
  #allocation1 [shape = 'u32[144,128]{1,0:T(1,128)}', space=vmem, size = 0x12000, scoped, tag = 'internal scratch']
  %s0 = inlined_call_operand.vmem [shape: f32[128,256], index: 0, kind: input, shape index: {}]
  %s1 = inlined_call_operand.vmem [shape: f32[128,2], index: 1, kind: input, shape index: {}]
  %s2 = inlined_call_operand.vmem [shape: f32[128,256], index: 2, kind: output, shape index: {}]
  %s3 = sld [smem:[#allocation0]]
  $region18: #{adain.1} parent=0
    _
  %s5 = ssub.s32 1, %s3
  %s6 = scalar_select 0, %s5, %s3
  // Predicated region
  $region2: #{adain.1} parent=0 // pred_check
    _
  $region3: #{adain.1} parent=0 // pred_check_branch
    %8 = sbr.rel (0) target = $region5
  $region4: #{adain.1} parent=0 // pred_region
    _
  $region5: #{adain.1} parent=0 // pred_fallthru
    _
  // Predicated region
  $region6: #{adain.1} parent=0 // pred_check
    _
  $region7: #{adain.1} parent=0 // pred_check_branch
    %10 = sbr.rel (0) target = $region9
  $region8: #{adain.1} parent=0 // pred_region
    _
  $region9: #{adain.1} parent=0 // pred_fallthru
    _
  %v11 = vld [vmem:[%s0] sm:$0xff]
  %v12 = vld [vmem:[%s0 + $0x8] sm:$0xff]
  %v13 = vld [vmem:[%s0 + $0x10] sm:$0xff]
  %v14 = vld [vmem:[%s0 + $0x18] sm:$0xff]
  %v15 = vld [vmem:[%s0 + $0x20] sm:$0xff]
  %v16 = vld [vmem:[%s0 + $0x28] sm:$0xff]
  %v17 = vld [vmem:[%s0 + $0x30] sm:$0xff]
  %v18 = vld [vmem:[%s0 + $0x38] sm:$0xff]
  %v19 = vld [vmem:[%s0 + $0x40] sm:$0xff]
  %v20 = vld [vmem:[%s0 + $0x48] sm:$0xff]
  %v21 = vld [vmem:[%s0 + $0x50] sm:$0xff]
  %v22 = vld [vmem:[%s0 + $0x58] sm:$0xff]
  %v23 = vld [vmem:[%s0 + $0x60] sm:$0xff]
  %v24 = vld [vmem:[%s0 + $0x68] sm:$0xff]
  %v25 = vld [vmem:[%s0 + $0x70] sm:$0xff]
  %v26 = vld [vmem:[%s0 + $0x78] sm:$0xff]
  %v27 = vld [vmem:[%s0 + $0x80] sm:$0xff]
  %v28 = vld [vmem:[%s0 + $0x88] sm:$0xff]
  %v29 = vld [vmem:[%s0 + $0x90] sm:$0xff]
  %v30 = vld [vmem:[%s0 + $0x98] sm:$0xff]
  %v31 = vld [vmem:[%s0 + $0xa0] sm:$0xff]
  %v32 = vld [vmem:[%s0 + $0xa8] sm:$0xff]
  %v33 = vld [vmem:[%s0 + $0xb0] sm:$0xff]
  %v34 = vld [vmem:[%s0 + $0xb8] sm:$0xff]
  %v35 = vld [vmem:[%s0 + $0xc0] sm:$0xff]
  %v36 = vld [vmem:[%s0 + $0xc8] sm:$0xff]
  %v37 = vld [vmem:[%s0 + $0xd0] sm:$0xff]
  %v38 = vld [vmem:[%s0 + $0xd8] sm:$0xff]
  %v39 = vld [vmem:[%s0 + $0xe0] sm:$0xff]
  %v40 = vld [vmem:[%s0 + $0xe8] sm:$0xff]
  %v41 = vld [vmem:[%s0 + $0xf0] sm:$0xff]
  %v42 = vld [vmem:[%s0 + $0xf8] sm:$0xff]
  %v43 = vadd.f32 %v11, %v12
  %44 = vadd.xlane.f32.xlu0 %v43
  %v45 = vpop.xlane.xlu0 %44
  %v46 = vadd.f32 %v13, %v14
  %47 = vadd.xlane.f32.xlu0 %v46
  %v48 = vpop.xlane.xlu0 %47
  %v49 = vadd.f32 %v15, %v16
  %50 = vadd.xlane.f32.xlu0 %v49
  %v51 = vpop.xlane.xlu0 %50
  %v52 = vadd.f32 %v17, %v18
  %53 = vadd.xlane.f32.xlu0 %v52
  %v54 = vpop.xlane.xlu0 %53
  %v55 = vadd.f32 %v19, %v20
  %56 = vadd.xlane.f32.xlu0 %v55
  %v57 = vpop.xlane.xlu0 %56
  %v58 = vadd.f32 %v21, %v22
  %59 = vadd.xlane.f32.xlu0 %v58
  %v60 = vpop.xlane.xlu0 %59
  %v61 = vadd.f32 %v23, %v24
  %62 = vadd.xlane.f32.xlu0 %v61
  %v63 = vpop.xlane.xlu0 %62
  %v64 = vadd.f32 %v25, %v26
  %65 = vadd.xlane.f32.xlu0 %v64
  %v66 = vpop.xlane.xlu0 %65
  %v67 = vadd.f32 %v27, %v28
  %68 = vadd.xlane.f32.xlu0 %v67
  %v69 = vpop.xlane.xlu0 %68
  %v70 = vadd.f32 %v29, %v30
  %71 = vadd.xlane.f32.xlu0 %v70
  %v72 = vpop.xlane.xlu0 %71
  %v73 = vadd.f32 %v31, %v32
  %74 = vadd.xlane.f32.xlu0 %v73
  %v75 = vpop.xlane.xlu0 %74
  %v76 = vadd.f32 %v33, %v34
  %77 = vadd.xlane.f32.xlu0 %v76
  %v78 = vpop.xlane.xlu0 %77
  %v79 = vadd.f32 %v35, %v36
  %80 = vadd.xlane.f32.xlu0 %v79
  %v81 = vpop.xlane.xlu0 %80
  %v82 = vadd.f32 %v37, %v38
  %83 = vadd.xlane.f32.xlu0 %v82
  %v84 = vpop.xlane.xlu0 %83
  %v85 = vadd.f32 %v39, %v40
  %86 = vadd.xlane.f32.xlu0 %v85
  %v87 = vpop.xlane.xlu0 %86
  %v88 = vadd.f32 %v41, %v42
  %89 = vadd.xlane.f32.xlu0 %v88
  %v90 = vpop.xlane.xlu0 %89
  %v91 = vrcp.pop 256.0
  %v92 = vmul.f32 %v45, %v91
  %v93 = vmul.f32 %v48, %v91
  %v94 = vmul.f32 %v51, %v91
  %v95 = vmul.f32 %v54, %v91
  %v96 = vmul.f32 %v57, %v91
  %v97 = vmul.f32 %v60, %v91
  %v98 = vmul.f32 %v63, %v91
  %v99 = vmul.f32 %v66, %v91
  %v100 = vmul.f32 %v69, %v91
  %v101 = vmul.f32 %v72, %v91
  %v102 = vmul.f32 %v75, %v91
  %v103 = vmul.f32 %v78, %v91
  %v104 = vmul.f32 %v81, %v91
  %v105 = vmul.f32 %v84, %v91
  %v106 = vmul.f32 %v87, %v91
  %v107 = vmul.f32 %v90, %v91
  %v108 = vsub.f32 %v11, %v92
  %v109 = vsub.f32 %v12, %v92
  %v110 = vsub.f32 %v13, %v93
  %v111 = vsub.f32 %v14, %v93
  %v112 = vsub.f32 %v15, %v94
  %v113 = vsub.f32 %v16, %v94
  %v114 = vsub.f32 %v17, %v95
  %v115 = vsub.f32 %v18, %v95
  %v116 = vsub.f32 %v19, %v96
  %v117 = vsub.f32 %v20, %v96
  %v118 = vsub.f32 %v21, %v97
  %v119 = vsub.f32 %v22, %v97
  %v120 = vsub.f32 %v23, %v98
  %v121 = vsub.f32 %v24, %v98
  %v122 = vsub.f32 %v25, %v99
  %v123 = vsub.f32 %v26, %v99
  %v124 = vsub.f32 %v27, %v100
  %v125 = vsub.f32 %v28, %v100
  %v126 = vsub.f32 %v29, %v101
  %v127 = vsub.f32 %v30, %v101
  %v128 = vsub.f32 %v31, %v102
  %v129 = vsub.f32 %v32, %v102
  %v130 = vsub.f32 %v33, %v103
  %v131 = vsub.f32 %v34, %v103
  %v132 = vsub.f32 %v35, %v104
  %v133 = vsub.f32 %v36, %v104
  %v134 = vsub.f32 %v37, %v105
  %v135 = vsub.f32 %v38, %v105
  %v136 = vsub.f32 %v39, %v106
  %v137 = vsub.f32 %v40, %v106
  %v138 = vsub.f32 %v41, %v107
  %v139 = vsub.f32 %v42, %v107
  %v140 = vmul.f32 %v108, %v108
  %v141 = vmul.f32 %v109, %v109
  %v142 = vmul.f32 %v110, %v110
  %v143 = vmul.f32 %v111, %v111
  %v144 = vmul.f32 %v112, %v112
  %v145 = vmul.f32 %v113, %v113
  %v146 = vmul.f32 %v114, %v114
  %v147 = vmul.f32 %v115, %v115
  %v148 = vmul.f32 %v116, %v116
  %v149 = vmul.f32 %v117, %v117
  %v150 = vmul.f32 %v118, %v118
  %v151 = vmul.f32 %v119, %v119
  %v152 = vmul.f32 %v120, %v120
  %v153 = vmul.f32 %v121, %v121
  %v154 = vmul.f32 %v122, %v122
  %v155 = vmul.f32 %v123, %v123
  %v156 = vmul.f32 %v124, %v124
  %v157 = vmul.f32 %v125, %v125
  %v158 = vmul.f32 %v126, %v126
  %v159 = vmul.f32 %v127, %v127
  %v160 = vmul.f32 %v128, %v128
  %v161 = vmul.f32 %v129, %v129
  %v162 = vmul.f32 %v130, %v130
  %v163 = vmul.f32 %v131, %v131
  %v164 = vmul.f32 %v132, %v132
  %v165 = vmul.f32 %v133, %v133
  %v166 = vmul.f32 %v134, %v134
  %v167 = vmul.f32 %v135, %v135
  %v168 = vmul.f32 %v136, %v136
  %v169 = vmul.f32 %v137, %v137
  %v170 = vmul.f32 %v138, %v138
  %v171 = vmul.f32 %v139, %v139
  %v172 = vadd.f32 %v140, %v141
  %173 = vadd.xlane.f32.xlu0 %v172
  %v174 = vpop.xlane.xlu0 %173
  %v175 = vadd.f32 %v142, %v143
  %176 = vadd.xlane.f32.xlu0 %v175
  %v177 = vpop.xlane.xlu0 %176
  %v178 = vadd.f32 %v144, %v145
  %179 = vadd.xlane.f32.xlu0 %v178
  %v180 = vpop.xlane.xlu0 %179
  %v181 = vadd.f32 %v146, %v147
  %182 = vadd.xlane.f32.xlu0 %v181
  %v183 = vpop.xlane.xlu0 %182
  %v184 = vadd.f32 %v148, %v149
  %185 = vadd.xlane.f32.xlu0 %v184
  %v186 = vpop.xlane.xlu0 %185
  %v187 = vadd.f32 %v150, %v151
  %188 = vadd.xlane.f32.xlu0 %v187
  %v189 = vpop.xlane.xlu0 %188
  %v190 = vadd.f32 %v152, %v153
  %191 = vadd.xlane.f32.xlu0 %v190
  %v192 = vpop.xlane.xlu0 %191
  %v193 = vadd.f32 %v154, %v155
  %194 = vadd.xlane.f32.xlu0 %v193
  %v195 = vpop.xlane.xlu0 %194
  %v196 = vadd.f32 %v156, %v157
  %197 = vadd.xlane.f32.xlu0 %v196
  %v198 = vpop.xlane.xlu0 %197
  %v199 = vadd.f32 %v158, %v159
  %200 = vadd.xlane.f32.xlu0 %v199
  %v201 = vpop.xlane.xlu0 %200
  %v202 = vadd.f32 %v160, %v161
  %203 = vadd.xlane.f32.xlu0 %v202
  %v204 = vpop.xlane.xlu0 %203
  %v205 = vadd.f32 %v162, %v163
  %206 = vadd.xlane.f32.xlu0 %v205
  %v207 = vpop.xlane.xlu0 %206
  %v208 = vadd.f32 %v164, %v165
  %209 = vadd.xlane.f32.xlu0 %v208
  %v210 = vpop.xlane.xlu0 %209
  %v211 = vadd.f32 %v166, %v167
  %212 = vadd.xlane.f32.xlu0 %v211
  %v213 = vpop.xlane.xlu0 %212
  %v214 = vadd.f32 %v168, %v169
  %215 = vadd.xlane.f32.xlu0 %v214
  %v216 = vpop.xlane.xlu0 %215
  %v217 = vadd.f32 %v170, %v171
  %218 = vadd.xlane.f32.xlu0 %v217
  %v219 = vpop.xlane.xlu0 %218
  %v220 = vmul.f32 %v174, %v91
  %v221 = vmul.f32 %v177, %v91
  %v222 = vmul.f32 %v180, %v91
  %v223 = vmul.f32 %v183, %v91
  %v224 = vmul.f32 %v186, %v91
  %v225 = vmul.f32 %v189, %v91
  %v226 = vmul.f32 %v192, %v91
  %v227 = vmul.f32 %v195, %v91
  %v228 = vmul.f32 %v198, %v91
  %v229 = vmul.f32 %v201, %v91
  %v230 = vmul.f32 %v204, %v91
  %v231 = vmul.f32 %v207, %v91
  %v232 = vmul.f32 %v210, %v91
  %v233 = vmul.f32 %v213, %v91
  %v234 = vmul.f32 %v216, %v91
  %v235 = vmul.f32 %v219, %v91
  %s236 = smul.u32 0, 128
  %s237 = scalar_lea.vmem %s1, %s236
  %v238 = vld [vmem:[%s237] sm:$0xff]
  %v239 = vld [vmem:[%s237 + $0x8] sm:$0xff]
  %v240 = vld [vmem:[%s237 + $0x10] sm:$0xff]
  %v241 = vld [vmem:[%s237 + $0x18] sm:$0xff]
  %v242 = vld [vmem:[%s237 + $0x20] sm:$0xff]
  %v243 = vld [vmem:[%s237 + $0x28] sm:$0xff]
  %v244 = vld [vmem:[%s237 + $0x30] sm:$0xff]
  %v245 = vld [vmem:[%s237 + $0x38] sm:$0xff]
  %v246 = vld [vmem:[%s237 + $0x40] sm:$0xff]
  %v247 = vld [vmem:[%s237 + $0x48] sm:$0xff]
  %v248 = vld [vmem:[%s237 + $0x50] sm:$0xff]
  %v249 = vld [vmem:[%s237 + $0x58] sm:$0xff]
  %v250 = vld [vmem:[%s237 + $0x60] sm:$0xff]
  %v251 = vld [vmem:[%s237 + $0x68] sm:$0xff]
  %v252 = vld [vmem:[%s237 + $0x70] sm:$0xff]
  %v253 = vld [vmem:[%s237 + $0x78] sm:$0xff]
  %v254 = vadd.f32 %v238, 1.0
  %v255 = vadd.f32 %v239, 1.0
  %v256 = vadd.f32 %v240, 1.0
  %v257 = vadd.f32 %v241, 1.0
  %v258 = vadd.f32 %v242, 1.0
  %v259 = vadd.f32 %v243, 1.0
  %v260 = vadd.f32 %v244, 1.0
  %v261 = vadd.f32 %v245, 1.0
  %v262 = vadd.f32 %v246, 1.0
  %v263 = vadd.f32 %v247, 1.0
  %v264 = vadd.f32 %v248, 1.0
  %v265 = vadd.f32 %v249, 1.0
  %v266 = vadd.f32 %v250, 1.0
  %v267 = vadd.f32 %v251, 1.0
  %v268 = vadd.f32 %v252, 1.0
  %v269 = vadd.f32 %v253, 1.0
  %v270 = vadd.f32 %v220, 1e-05
  %v271 = vadd.f32 %v221, 1e-05
  %v272 = vadd.f32 %v222, 1e-05
  %v273 = vadd.f32 %v223, 1e-05
  %v274 = vadd.f32 %v224, 1e-05
  %v275 = vadd.f32 %v225, 1e-05
  %v276 = vadd.f32 %v226, 1e-05
  %v277 = vadd.f32 %v227, 1e-05
  %v278 = vadd.f32 %v228, 1e-05
  %v279 = vadd.f32 %v229, 1e-05
  %v280 = vadd.f32 %v230, 1e-05
  %v281 = vadd.f32 %v231, 1e-05
  %v282 = vadd.f32 %v232, 1e-05
  %v283 = vadd.f32 %v233, 1e-05
  %v284 = vadd.f32 %v234, 1e-05
  %v285 = vadd.f32 %v235, 1e-05
  %v286 = vrsqrt.pop %v270
  %v287 = vrsqrt.pop %v271
  %v288 = vrsqrt.pop %v272
  %v289 = vrsqrt.pop %v273
  %v290 = vrsqrt.pop %v274
  %v291 = vrsqrt.pop %v275
  %v292 = vrsqrt.pop %v276
  %v293 = vrsqrt.pop %v277
  %v294 = vrsqrt.pop %v278
  %v295 = vrsqrt.pop %v279
  %v296 = vrsqrt.pop %v280
  %v297 = vrsqrt.pop %v281
  %v298 = vrsqrt.pop %v282
  %v299 = vrsqrt.pop %v283
  %v300 = vrsqrt.pop %v284
  %v301 = vrsqrt.pop %v285
  %v302 = vmul.f32 %v254, %v286
  %v303 = vmul.f32 %v255, %v287
  %v304 = vmul.f32 %v256, %v288
  %v305 = vmul.f32 %v257, %v289
  %v306 = vmul.f32 %v258, %v290
  %v307 = vmul.f32 %v259, %v291
  %v308 = vmul.f32 %v260, %v292
  %v309 = vmul.f32 %v261, %v293
  %v310 = vmul.f32 %v262, %v294
  %v311 = vmul.f32 %v263, %v295
  %v312 = vmul.f32 %v264, %v296
  %v313 = vmul.f32 %v265, %v297
  %v314 = vmul.f32 %v266, %v298
  %v315 = vmul.f32 %v267, %v299
  %v316 = vmul.f32 %v268, %v300
  %v317 = vmul.f32 %v269, %v301
  %319 = vset.pattern.permute.xlu0 1
  %320 = vperm.xlu0 %319, %v302
  %v321 = vpop.permute.xlu0 %320
  %324 = vset.pattern.permute.xlu0 1
  %325 = vperm.xlu0 %324, %v303
  %v326 = vpop.permute.xlu0 %325
  %329 = vset.pattern.permute.xlu0 1
  %330 = vperm.xlu0 %329, %v304
  %v331 = vpop.permute.xlu0 %330
  %334 = vset.pattern.permute.xlu0 1
  %335 = vperm.xlu0 %334, %v305
  %v336 = vpop.permute.xlu0 %335
  %339 = vset.pattern.permute.xlu0 1
  %340 = vperm.xlu0 %339, %v306
  %v341 = vpop.permute.xlu0 %340
  %344 = vset.pattern.permute.xlu0 1
  %345 = vperm.xlu0 %344, %v307
  %v346 = vpop.permute.xlu0 %345
  %349 = vset.pattern.permute.xlu0 1
  %350 = vperm.xlu0 %349, %v308
  %v351 = vpop.permute.xlu0 %350
  %354 = vset.pattern.permute.xlu0 1
  %355 = vperm.xlu0 %354, %v309
  %v356 = vpop.permute.xlu0 %355
  %359 = vset.pattern.permute.xlu0 1
  %360 = vperm.xlu0 %359, %v310
  %v361 = vpop.permute.xlu0 %360
  %364 = vset.pattern.permute.xlu0 1
  %365 = vperm.xlu0 %364, %v311
  %v366 = vpop.permute.xlu0 %365
  %369 = vset.pattern.permute.xlu0 1
  %370 = vperm.xlu0 %369, %v312
  %v371 = vpop.permute.xlu0 %370
  %374 = vset.pattern.permute.xlu0 1
  %375 = vperm.xlu0 %374, %v313
  %v376 = vpop.permute.xlu0 %375
  %379 = vset.pattern.permute.xlu0 1
  %380 = vperm.xlu0 %379, %v314
  %v381 = vpop.permute.xlu0 %380
  %384 = vset.pattern.permute.xlu0 1
  %385 = vperm.xlu0 %384, %v315
  %v386 = vpop.permute.xlu0 %385
  %389 = vset.pattern.permute.xlu0 1
  %390 = vperm.xlu0 %389, %v316
  %v391 = vpop.permute.xlu0 %390
  %394 = vset.pattern.permute.xlu0 1
  %395 = vperm.xlu0 %394, %v317
  %v396 = vpop.permute.xlu0 %395
  %v398 = vmul.f32 %v108, %v321
  %v399 = vmul.f32 %v109, %v321
  %v400 = vmul.f32 %v110, %v326
  %v401 = vmul.f32 %v111, %v326
  %v402 = vmul.f32 %v112, %v331
  %v403 = vmul.f32 %v113, %v331
  %v404 = vmul.f32 %v114, %v336
  %v405 = vmul.f32 %v115, %v336
  %v406 = vmul.f32 %v116, %v341
  %v407 = vmul.f32 %v117, %v341
  %v408 = vmul.f32 %v118, %v346
  %v409 = vmul.f32 %v119, %v346
  %v410 = vmul.f32 %v120, %v351
  %v411 = vmul.f32 %v121, %v351
  %v412 = vmul.f32 %v122, %v356
  %v413 = vmul.f32 %v123, %v356
  %v414 = vmul.f32 %v124, %v361
  %v415 = vmul.f32 %v125, %v361
  %v416 = vmul.f32 %v126, %v366
  %v417 = vmul.f32 %v127, %v366
  %v418 = vmul.f32 %v128, %v371
  %v419 = vmul.f32 %v129, %v371
  %v420 = vmul.f32 %v130, %v376
  %v421 = vmul.f32 %v131, %v376
  %v422 = vmul.f32 %v132, %v381
  %v423 = vmul.f32 %v133, %v381
  %v424 = vmul.f32 %v134, %v386
  %v425 = vmul.f32 %v135, %v386
  %v426 = vmul.f32 %v136, %v391
  %v427 = vmul.f32 %v137, %v391
  %v428 = vmul.f32 %v138, %v396
  %v429 = vmul.f32 %v139, %v396
  %431 = vset.pattern.permute.xlu0 0
  %432 = vperm.xlu0 %431, %v238
  %v433 = vpop.permute.xlu0 %432
  %436 = vset.pattern.permute.xlu0 0
  %437 = vperm.xlu0 %436, %v239
  %v438 = vpop.permute.xlu0 %437
  %441 = vset.pattern.permute.xlu0 0
  %442 = vperm.xlu0 %441, %v240
  %v443 = vpop.permute.xlu0 %442
  %446 = vset.pattern.permute.xlu0 0
  %447 = vperm.xlu0 %446, %v241
  %v448 = vpop.permute.xlu0 %447
  %451 = vset.pattern.permute.xlu0 0
  %452 = vperm.xlu0 %451, %v242
  %v453 = vpop.permute.xlu0 %452
  %456 = vset.pattern.permute.xlu0 0
  %457 = vperm.xlu0 %456, %v243
  %v458 = vpop.permute.xlu0 %457
  %461 = vset.pattern.permute.xlu0 0
  %462 = vperm.xlu0 %461, %v244
  %v463 = vpop.permute.xlu0 %462
  %466 = vset.pattern.permute.xlu0 0
  %467 = vperm.xlu0 %466, %v245
  %v468 = vpop.permute.xlu0 %467
  %471 = vset.pattern.permute.xlu0 0
  %472 = vperm.xlu0 %471, %v246
  %v473 = vpop.permute.xlu0 %472
  %476 = vset.pattern.permute.xlu0 0
  %477 = vperm.xlu0 %476, %v247
  %v478 = vpop.permute.xlu0 %477
  %481 = vset.pattern.permute.xlu0 0
  %482 = vperm.xlu0 %481, %v248
  %v483 = vpop.permute.xlu0 %482
  %486 = vset.pattern.permute.xlu0 0
  %487 = vperm.xlu0 %486, %v249
  %v488 = vpop.permute.xlu0 %487
  %491 = vset.pattern.permute.xlu0 0
  %492 = vperm.xlu0 %491, %v250
  %v493 = vpop.permute.xlu0 %492
  %496 = vset.pattern.permute.xlu0 0
  %497 = vperm.xlu0 %496, %v251
  %v498 = vpop.permute.xlu0 %497
  %501 = vset.pattern.permute.xlu0 0
  %502 = vperm.xlu0 %501, %v252
  %v503 = vpop.permute.xlu0 %502
  %506 = vset.pattern.permute.xlu0 0
  %507 = vperm.xlu0 %506, %v253
  %v508 = vpop.permute.xlu0 %507
  %v510 = vadd.f32 %v398, %v433
  %v511 = vadd.f32 %v399, %v433
  %v512 = vadd.f32 %v400, %v438
  %v513 = vadd.f32 %v401, %v438
  %v514 = vadd.f32 %v402, %v443
  %v515 = vadd.f32 %v403, %v443
  %v516 = vadd.f32 %v404, %v448
  %v517 = vadd.f32 %v405, %v448
  %v518 = vadd.f32 %v406, %v453
  %v519 = vadd.f32 %v407, %v453
  %v520 = vadd.f32 %v408, %v458
  %v521 = vadd.f32 %v409, %v458
  %v522 = vadd.f32 %v410, %v463
  %v523 = vadd.f32 %v411, %v463
  %v524 = vadd.f32 %v412, %v468
  %v525 = vadd.f32 %v413, %v468
  %v526 = vadd.f32 %v414, %v473
  %v527 = vadd.f32 %v415, %v473
  %v528 = vadd.f32 %v416, %v478
  %v529 = vadd.f32 %v417, %v478
  %v530 = vadd.f32 %v418, %v483
  %v531 = vadd.f32 %v419, %v483
  %v532 = vadd.f32 %v420, %v488
  %v533 = vadd.f32 %v421, %v488
  %v534 = vadd.f32 %v422, %v493
  %v535 = vadd.f32 %v423, %v493
  %v536 = vadd.f32 %v424, %v498
  %v537 = vadd.f32 %v425, %v498
  %v538 = vadd.f32 %v426, %v503
  %v539 = vadd.f32 %v427, %v503
  %v540 = vadd.f32 %v428, %v508
  %v541 = vadd.f32 %v429, %v508
  %542 = vst [vmem:[%s2] sm:$0xff] %v510
  %543 = vst [vmem:[%s2 + $0x8] sm:$0xff] %v511
  %544 = vst [vmem:[%s2 + $0x10] sm:$0xff] %v512
  %545 = vst [vmem:[%s2 + $0x18] sm:$0xff] %v513
  %546 = vst [vmem:[%s2 + $0x20] sm:$0xff] %v514
  %547 = vst [vmem:[%s2 + $0x28] sm:$0xff] %v515
  %548 = vst [vmem:[%s2 + $0x30] sm:$0xff] %v516
  %549 = vst [vmem:[%s2 + $0x38] sm:$0xff] %v517
  %550 = vst [vmem:[%s2 + $0x40] sm:$0xff] %v518
  %551 = vst [vmem:[%s2 + $0x48] sm:$0xff] %v519
  %552 = vst [vmem:[%s2 + $0x50] sm:$0xff] %v520
  %553 = vst [vmem:[%s2 + $0x58] sm:$0xff] %v521
  %554 = vst [vmem:[%s2 + $0x60] sm:$0xff] %v522
  %555 = vst [vmem:[%s2 + $0x68] sm:$0xff] %v523
  %556 = vst [vmem:[%s2 + $0x70] sm:$0xff] %v524
  %557 = vst [vmem:[%s2 + $0x78] sm:$0xff] %v525
  %558 = vst [vmem:[%s2 + $0x80] sm:$0xff] %v526
  %559 = vst [vmem:[%s2 + $0x88] sm:$0xff] %v527
  %560 = vst [vmem:[%s2 + $0x90] sm:$0xff] %v528
  %561 = vst [vmem:[%s2 + $0x98] sm:$0xff] %v529
  %562 = vst [vmem:[%s2 + $0xa0] sm:$0xff] %v530
  %563 = vst [vmem:[%s2 + $0xa8] sm:$0xff] %v531
  %564 = vst [vmem:[%s2 + $0xb0] sm:$0xff] %v532
  %565 = vst [vmem:[%s2 + $0xb8] sm:$0xff] %v533
  %566 = vst [vmem:[%s2 + $0xc0] sm:$0xff] %v534
  %567 = vst [vmem:[%s2 + $0xc8] sm:$0xff] %v535
  %568 = vst [vmem:[%s2 + $0xd0] sm:$0xff] %v536
  %569 = vst [vmem:[%s2 + $0xd8] sm:$0xff] %v537
  %570 = vst [vmem:[%s2 + $0xe0] sm:$0xff] %v538
  %571 = vst [vmem:[%s2 + $0xe8] sm:$0xff] %v539
  %572 = vst [vmem:[%s2 + $0xf0] sm:$0xff] %v540
  %573 = vst [vmem:[%s2 + $0xf8] sm:$0xff] %v541
  // Predicated region
  $region10: #{adain.1} parent=0 // pred_check
    _
  $region11: #{adain.1} parent=0 // pred_check_branch
    %575 = sbr.rel (0) target = $region13
  $region12: #{adain.1} parent=0 // pred_region
    _
  $region13: #{adain.1} parent=0 // pred_fallthru
    _
  // Predicated region
  $region14: #{adain.1} parent=0 // pred_check
    _
  $region15: #{adain.1} parent=0 // pred_check_branch
    %577 = sbr.rel (0) target = $region17
  $region16: #{adain.1} parent=0 // pred_region
    _
  $region17: #{adain.1} parent=0 // pred_fallthru
    _

</llo_original>
